<compile_context>
chip_gen: v6e
topology: v6e:2x2x1
jax: 0.10.0
libtpu: 0.0.40
codegen_flags: <defaults>
</compile_context>

<pallas_src>
import functools

import jax
import jax.numpy as jnp
from jax.experimental import pallas as pl
from jax.experimental.pallas import tpu as pltpu

LANE = 128
TARGET_BLOCK_ROWS = 8192              # 8192 * 128 * 4 B = 4 MiB per f32 input block
NCORES = 2                            # leading "parallel" axis (megacore split on v7x)
VMEM_LIMIT_BYTES = 32 * 1024 * 1024   # 2 inputs x 2 bufs x 4 MiB = 16 MiB + headroom


def _round_up(a, b):
    return pl.cdiv(a, b) * b


def _dice_bce_partial_kernel(x_ref, t_ref, out_ref, *,
                             blocks_per_chunk, num_blocks, rem_rows, has_overhang):
    """Accumulates per-lane partial sums into this chunk's resident output block.

    out_ref rows: 0-7 = sum(p*t), 8-15 = sum(p + t), 16-23 = sum(bce).
    """
    c = pl.program_id(0)
    j = pl.program_id(1)

    @pl.when(j == 0)
    def _():
        out_ref[...] = jnp.zeros_like(out_ref)

    block_rows = x_ref.shape[0]
    last_partial = rem_rows != block_rows   # static Python bool

    def accumulate(mask):
        x = x_ref[...].astype(jnp.float32)
        t = t_ref[...].astype(jnp.float32)
        # p = sigmoid(x); log(p)/log(1-p) clamped at -100 like
        # F.binary_cross_entropy.  Only 3 EUP ops/element: exp, recip, log1p.
        e = jnp.exp(-x)
        p = 1.0 / (1.0 + e)
        log_p_raw = -jnp.log1p(e)                       # == log(sigmoid(x))
        log_p = jnp.maximum(log_p_raw, -100.0)
        log_1mp = jnp.maximum(log_p_raw - x, -100.0)    # == log(1 - sigmoid(x))
        # Match torch's sigmoid-then-log saturation exactly at the extremes:
        log_1mp = jnp.where(p >= 1.0, -100.0, log_1mp)  # log1p(-1) -> -inf -> -100
        log_1mp = jnp.where(p <= 0.0, 0.0, log_1mp)     # log1p(-0) -> 0
        # t*log_p + (1-t)*log_1mp == log_1mp + t*(log_p - log_1mp)  (one less mul)
        bce = -(log_1mp + t * (log_p - log_1mp))

        pt = p * t          # Dice numerator
        ps = p + t          # Dice denominator only ever needs the combined sum
        if mask is not None:
            # where-select (not multiply) so OOB-garbage rows cannot inject NaNs.
            pt = jnp.where(mask, pt, 0.0)
            ps = jnp.where(mask, ps, 0.0)
            bce = jnp.where(mask, bce, 0.0)

        def fold(v):  # (block_rows, LANE) -> (8, LANE): sublane-aligned adds only
            return v.reshape(block_rows // 8, 8, LANE).sum(axis=0)

        out_ref[0:8, :] += fold(pt)
        out_ref[8:16, :] += fold(ps)
        out_ref[16:24, :] += fold(bce)

    if not last_partial and not has_overhang:
        accumulate(None)                       # every block is full: no masking
        return

    lb = c * blocks_per_chunk + j              # linear block index
    num_full = num_blocks - 1 if last_partial else num_blocks

    if num_full > 0:
        @pl.when(lb < num_full)
        def _():
            accumulate(None)                   # interior blocks: mask-free fast path

    if last_partial:
        @pl.when(lb == num_blocks - 1)
        def _():
            # Block-local row mask; no global int32 index => no 2**31 limit.
            row = jax.lax.broadcasted_iota(jnp.int32, (block_rows, LANE), 0)
            accumulate(row < rem_rows)
    # Blocks with lb >= num_blocks (grid overhang) fall through both whens: skipped.


def dice_bce_loss(inputs, targets, smooth=1.0):
    """Pallas implementation of DiceBCELoss.forward (returns a scalar f32)."""
    x = inputs.reshape(-1)
    t = targets.reshape(-1)
    n = x.shape[0]

    rows = n // LANE
    tail = n - rows * LANE

    inter = jnp.float32(0.0)
    sum_pt = jnp.float32(0.0)   # sum(p) + sum(t)
    sum_bce = jnp.float32(0.0)

    if rows > 0:
        # Lane-aligned prefix streamed through the kernel (no host-side pad copy).
        if tail:
            x_main, t_main = x[: rows * LANE], t[: rows * LANE]
        else:
            x_main, t_main = x, t
        x2 = x_main.reshape(rows, LANE)
        t2 = t_main.reshape(rows, LANE)

        block_rows = min(TARGET_BLOCK_ROWS, _round_up(rows, 8))
        num_blocks = pl.cdiv(rows, block_rows)
        # Unconditional 2-chunk split whenever there are >= 2 blocks: keeps both
        # v7x TensorCores busy.  On 1-TC chips the only cost for odd block counts
        # is one clamped (and skipped) overhang block of DMA.
        nchunks = NCORES if num_blocks >= NCORES else 1
        blocks_per_chunk = pl.cdiv(num_blocks, nchunks)
        has_overhang = nchunks * blocks_per_chunk > num_blocks
        rem_rows = rows - (num_blocks - 1) * block_rows   # rows in the final block

        if has_overhang:
            def in_map(c, j):   # clamp overhang blocks onto the last real block
                return (jnp.minimum(c * blocks_per_chunk + j, num_blocks - 1), 0)
        else:
            def in_map(c, j):
                return (c * blocks_per_chunk + j, 0)

        kernel = functools.partial(
            _dice_bce_partial_kernel,
            blocks_per_chunk=blocks_per_chunk, num_blocks=num_blocks,
            rem_rows=rem_rows, has_overhang=has_overhang)

        partials = pl.pallas_call(
            kernel,
            out_shape=jax.ShapeDtypeStruct((nchunks * 24, LANE), jnp.float32),
            grid_spec=pltpu.PrefetchScalarGridSpec(
                num_scalar_prefetch=0,
                grid=(nchunks, blocks_per_chunk),
                in_specs=[pl.BlockSpec((block_rows, LANE), in_map),
                          pl.BlockSpec((block_rows, LANE), in_map)],
                out_specs=pl.BlockSpec((24, LANE), lambda c, j: (c, 0)),
            ),
            compiler_params=pltpu.CompilerParams(
                dimension_semantics=("parallel", "arbitrary"),
                vmem_limit_bytes=VMEM_LIMIT_BYTES),
            cost_estimate=pl.CostEstimate(
                flops=16 * rows * LANE,
                transcendentals=3 * rows * LANE,
                bytes_accessed=rows * LANE * (x2.dtype.itemsize
                                              + t2.dtype.itemsize)),
        )(x2, t2)

        # Tiny final combine (a few hundred floats) in plain JAX.
        sums = partials.reshape(nchunks, 3, 8, LANE).sum(axis=(0, 2, 3))  # (3,)
        inter, sum_pt, sum_bce = sums[0], sums[1], sums[2]

    if tail:
        # <=127 trailing elements folded in with plain JAX (avoids padding copies).
        xt = x[rows * LANE:].astype(jnp.float32)
        tt = t[rows * LANE:].astype(jnp.float32)
        p = jax.nn.sigmoid(xt)
        inter = inter + jnp.sum(p * tt)
        sum_pt = sum_pt + jnp.sum(p + tt)
        log_p = jnp.maximum(jnp.log(p), -100.0)
        log_1mp = jnp.maximum(jnp.log1p(-p), -100.0)
        sum_bce = sum_bce + jnp.sum(-(tt * log_p + (1.0 - tt) * log_1mp))

    dice_loss = 1.0 - (2.0 * inter + smooth) / (sum_pt + smooth)
    bce_mean = sum_bce / n
    return bce_mean + dice_loss


def _dice_bce_ref(inputs, targets, smooth=1.0):
    """Pure-JAX reference mirroring the PyTorch forward."""
    p = jax.nn.sigmoid(inputs.reshape(-1).astype(jnp.float32))
    t = targets.reshape(-1).astype(jnp.float32)
    inter = jnp.sum(p * t)
    dice = 1.0 - (2.0 * inter + smooth) / (jnp.sum(p) + jnp.sum(t) + smooth)
    log_p = jnp.maximum(jnp.log(p), -100.0)
    log_1mp = jnp.maximum(jnp.log1p(-p), -100.0)
    bce = jnp.mean(-(t * log_p + (1.0 - t) * log_1mp))
    return bce + dice


if __name__ == "__main__":
    key = jax.random.PRNGKey(0)
    k_x, k_t = jax.random.split(key)

    # NCHW logits and binary targets, like a segmentation head output.
    inputs = jax.random.normal(k_x, (2, 4, 16, 16), dtype=jnp.float32)
    targets = jax.random.bernoulli(k_t, p=0.5, shape=(2, 4, 16, 16)).astype(
        jnp.float32
    )

    loss = jax.block_until_ready(dice_bce_loss(inputs, targets, smooth=1.0))
    ref = jax.block_until_ready(_dice_bce_ref(inputs, targets, smooth=1.0))

    assert jnp.isfinite(loss), "non-finite loss"
    assert abs(float(loss) - float(ref)) < 1e-4, (float(loss), float(ref))
    print("KERNEL_OK")
</pallas_src>

<mosaic_0001>
module attributes {stable_mosaic.version = 11 : i64} {
  func.func @_dice_bce_partial_kernel(%arg0: i32, %arg1: i32, %arg2: memref<16x128xf32, #tpu.memory_space<vmem>>, %arg3: memref<16x128xf32, #tpu.memory_space<vmem>>, %arg4: memref<24x128xf32, #tpu.memory_space<vmem>>) attributes {dimension_semantics = [#tpu.dimension_semantics<parallel>, #tpu.dimension_semantics<arbitrary>], iteration_bounds = array<i64: 1, 1>, scalar_prefetch = 0 : i64, scratch_operands = 0 : i64, tpu.core_type = #tpu.core_type<tc>, window_params = [{transform_indices = @transform_0, window_bounds = array<i64: 16, 128>}, {transform_indices = @transform_1, window_bounds = array<i64: 16, 128>}, {transform_indices = @transform_2, window_bounds = array<i64: 24, 128>}]} {
    %c0_i32 = arith.constant 0 : i32
    %0 = arith.cmpi eq, %arg1, %c0_i32 : i32
    %1 = arith.extui %0 : i1 to i32
    %c0_i32_0 = arith.constant 0 : i32
    %2 = arith.cmpi ne, %1, %c0_i32_0 : i32
    scf.if %2 {
      %cst_27 = arith.constant 0.000000e+00 : f32
      %50 = vector.broadcast %cst_27 : f32 to vector<24x128xf32>
      %c0_28 = arith.constant 0 : index
      %c0_29 = arith.constant 0 : index
      %51 = vector.load %arg4[%c0_28, %c0_29] : memref<24x128xf32, #tpu.memory_space<vmem>>, vector<24x128xf32>
      tpu.vector_store %arg4[%c0_28, %c0_29], %50 {strides = array<i32>} : memref<24x128xf32, #tpu.memory_space<vmem>>, vector<24x128xf32>,
    } else {
    }
    %c0 = arith.constant 0 : index
    %c0_1 = arith.constant 0 : index
    %3 = vector.load %arg2[%c0, %c0_1] : memref<16x128xf32, #tpu.memory_space<vmem>>, vector<16x128xf32>
    %c0_2 = arith.constant 0 : index
    %c0_3 = arith.constant 0 : index
    %4 = vector.load %arg3[%c0_2, %c0_3] : memref<16x128xf32, #tpu.memory_space<vmem>>, vector<16x128xf32>
    %cst = arith.constant 0.000000e+00 : f32
    %5 = vector.broadcast %cst : f32 to vector<16x128xf32>
    %6 = arith.subf %5, %3 : vector<16x128xf32>
    %7 = math.exp %6 : vector<16x128xf32>
    %cst_4 = arith.constant 1.000000e+00 : f32
    %8 = vector.broadcast %cst_4 : f32 to vector<16x128xf32>
    %9 = arith.addf %8, %7 : vector<16x128xf32>
    %cst_5 = arith.constant 1.000000e+00 : f32
    %10 = vector.broadcast %cst_5 : f32 to vector<16x128xf32>
    %11 = arith.divf %10, %9 : vector<16x128xf32>
    %12 = math.log1p %7 : vector<16x128xf32>
    %cst_6 = arith.constant 0.000000e+00 : f32
    %13 = vector.broadcast %cst_6 : f32 to vector<16x128xf32>
    %14 = arith.subf %13, %12 : vector<16x128xf32>
    %cst_7 = arith.constant -1.000000e+02 : f32
    %15 = vector.broadcast %cst_7 : f32 to vector<16x128xf32>
    %16 = arith.maximumf %14, %15 : vector<16x128xf32>
    %17 = arith.subf %14, %3 : vector<16x128xf32>
    %cst_8 = arith.constant -1.000000e+02 : f32
    %18 = vector.broadcast %cst_8 : f32 to vector<16x128xf32>
    %19 = arith.maximumf %17, %18 : vector<16x128xf32>
    %cst_9 = arith.constant 1.000000e+00 : f32
    %20 = vector.broadcast %cst_9 : f32 to vector<16x128xf32>
    %21 = arith.cmpf oge, %11, %20 : vector<16x128xf32>
    %cst_10 = arith.constant -1.000000e+02 : f32
    %22 = vector.broadcast %cst_10 : f32 to vector<16x128xf32>
    %23 = arith.select %21, %22, %19 : vector<16x128xi1>, vector<16x128xf32>
    %cst_11 = arith.constant 0.000000e+00 : f32
    %24 = vector.broadcast %cst_11 : f32 to vector<16x128xf32>
    %25 = arith.cmpf ole, %11, %24 : vector<16x128xf32>
    %cst_12 = arith.constant 0.000000e+00 : f32
    %26 = vector.broadcast %cst_12 : f32 to vector<16x128xf32>
    %27 = arith.select %25, %26, %23 : vector<16x128xi1>, vector<16x128xf32>
    %28 = arith.subf %16, %27 : vector<16x128xf32>
    %29 = arith.mulf %4, %28 : vector<16x128xf32>
    %30 = arith.addf %27, %29 : vector<16x128xf32>
    %cst_13 = arith.constant 0.000000e+00 : f32
    %31 = vector.broadcast %cst_13 : f32 to vector<16x128xf32>
    %32 = arith.subf %31, %30 : vector<16x128xf32>
    %33 = arith.mulf %11, %4 : vector<16x128xf32>
    %34 = arith.addf %11, %4 : vector<16x128xf32>
    %c0_14 = arith.constant 0 : index
    %c0_15 = arith.constant 0 : index
    %35 = vector.load %arg4[%c0_14, %c0_15] : memref<24x128xf32, #tpu.memory_space<vmem>>, vector<8x128xf32>
    %36 = vector.shape_cast %33 : vector<16x128xf32> to vector<2x8x128xf32>
    %cst_16 = arith.constant dense<0.000000e+00> : vector<8x128xf32>
    %37 = vector.multi_reduction <add>, %36, %cst_16 [0] : vector<2x8x128xf32> to vector<8x128xf32>
    %38 = arith.addf %35, %37 : vector<8x128xf32>
    %c0_17 = arith.constant 0 : index
    %c0_18 = arith.constant 0 : index
    %39 = vector.load %arg4[%c0_17, %c0_18] : memref<24x128xf32, #tpu.memory_space<vmem>>, vector<8x128xf32>
    tpu.vector_store %arg4[%c0_17, %c0_18], %38 {strides = array<i32>} : memref<24x128xf32, #tpu.memory_space<vmem>>, vector<8x128xf32>,
    %c8 = arith.constant 8 : index
    %c0_19 = arith.constant 0 : index
    %40 = vector.load %arg4[%c8, %c0_19] : memref<24x128xf32, #tpu.memory_space<vmem>>, vector<8x128xf32>
    %41 = vector.shape_cast %34 : vector<16x128xf32> to vector<2x8x128xf32>
    %cst_20 = arith.constant dense<0.000000e+00> : vector<8x128xf32>
    %42 = vector.multi_reduction <add>, %41, %cst_20 [0] : vector<2x8x128xf32> to vector<8x128xf32>
    %43 = arith.addf %40, %42 : vector<8x128xf32>
    %c8_21 = arith.constant 8 : index
    %c0_22 = arith.constant 0 : index
    %44 = vector.load %arg4[%c8_21, %c0_22] : memref<24x128xf32, #tpu.memory_space<vmem>>, vector<8x128xf32>
    tpu.vector_store %arg4[%c8_21, %c0_22], %43 {strides = array<i32>} : memref<24x128xf32, #tpu.memory_space<vmem>>, vector<8x128xf32>,
    %c16 = arith.constant 16 : index
    %c0_23 = arith.constant 0 : index
    %45 = vector.load %arg4[%c16, %c0_23] : memref<24x128xf32, #tpu.memory_space<vmem>>, vector<8x128xf32>
    %46 = vector.shape_cast %32 : vector<16x128xf32> to vector<2x8x128xf32>
    %cst_24 = arith.constant dense<0.000000e+00> : vector<8x128xf32>
    %47 = vector.multi_reduction <add>, %46, %cst_24 [0] : vector<2x8x128xf32> to vector<8x128xf32>
    %48 = arith.addf %45, %47 : vector<8x128xf32>
    %c16_25 = arith.constant 16 : index
    %c0_26 = arith.constant 0 : index
    %49 = vector.load %arg4[%c16_25, %c0_26] : memref<24x128xf32, #tpu.memory_space<vmem>>, vector<8x128xf32>
    tpu.vector_store %arg4[%c16_25, %c0_26], %48 {strides = array<i32>} : memref<24x128xf32, #tpu.memory_space<vmem>>, vector<8x128xf32>,
    return
  }
  func.func @transform_0(%arg0: i32, %arg1: i32) -> (i32, i32) {
    %c1_i32 = arith.constant 1 : i32
    %0 = arith.muli %arg0, %c1_i32 : i32
    %1 = arith.addi %0, %arg1 : i32
    %c0_i32 = arith.constant 0 : i32
    %c0_i32_0 = arith.constant 0 : i32
    return %1, %c0_i32 : i32, i32
  }
  func.func @transform_1(%arg0: i32, %arg1: i32) -> (i32, i32) {
    %c1_i32 = arith.constant 1 : i32
    %0 = arith.muli %arg0, %c1_i32 : i32
    %1 = arith.addi %0, %arg1 : i32
    %c0_i32 = arith.constant 0 : i32
    %c0_i32_0 = arith.constant 0 : i32
    return %1, %c0_i32 : i32, i32
  }
  func.func @transform_2(%arg0: i32, %arg1: i32) -> (i32, i32) {
    %c0_i32 = arith.constant 0 : i32
    %c0_i32_0 = arith.constant 0 : i32
    return %arg0, %c0_i32 : i32, i32
  }
}

</mosaic_0001>

<llo_original>
// kernel: tpu_custom_call.1
$region0: #{tpu_custom_call.1}
  #allocation0 [shape = 'u32[]', space=smem, size = 0x4, offset = 0x4, fixed_abs, tag = 'smem constant byte address 0x4 - core index']
  #allocation1 [shape = 'u32[144,128]{1,0:T(1,128)}', space=vmem, size = 0x12000, scoped, tag = 'internal scratch']
  %s0 = inlined_call_operand.hbm [shape: f32[16,128], index: 0, kind: input, shape index: {}]
  %s1 = inlined_call_operand.hbm [shape: f32[16,128], index: 1, kind: input, shape index: {}]
  %s2 = inlined_call_operand.hbm [shape: f32[24,128], index: 2, kind: output, shape index: {}]
  %s3 = sld [smem:[#allocation0]]
  $region30: #{tpu_custom_call.1} parent=0
    _
  %s5 = ssub.s32 1, %s3
  %s6 = scalar_select 0, %s5, %s3
  $region1: #{tpu_custom_call.1} parent=0
    #allocation2 [shape = 'u8[8192]{0}', space=vmem, size = 0x2000, scoped, tag = 'input window, operand 0, single buffered']
    #allocation3 [shape = 's32[1]{0}', space=sflag, size = 0x4, scoped, tag = 'scoped memory for tpu_custom_call.1']
    #allocation4 [shape = 's32[1]{0}', space=sflag, size = 0x4, scoped, tag = 'scoped memory for tpu_custom_call.1']
    #allocation5 [shape = 'u8[8192]{0}', space=vmem, size = 0x2000, scoped, tag = 'input window, operand 1, single buffered']
    #allocation6 [shape = 's32[1]{0}', space=sflag, size = 0x4, scoped, tag = 'scoped memory for tpu_custom_call.1']
    #allocation7 [shape = 'u8[12288]{0}', space=vmem, size = 0x3000, scoped, tag = 'output window, operand 0, single buffered']
    %7 = vsyncpa [#allocation3], 0
    %8 = vsyncpa [#allocation6], 0
    %9 = vsyncpa [#allocation4], 0
    // Predicated region
    $region2: #{tpu_custom_call.1} parent=1 // pred_check
      _
    $region3: #{tpu_custom_call.1} parent=1 // pred_check_branch
      %11 = sbr.rel (0) target = $region5
    $region4: #{tpu_custom_call.1} parent=1 // pred_region
      %s12 = sadd.s32 0, 0
      %s13 = smul.u32 2, %s12
      %s15 = ssub.s32 256, 256
      %16 = vsyncadd [#allocation3], %s15
      %s17 = smul.addr %s13, 128
      %s18 = scalar_lea.hbm %s0, %s17
      %s19 = sshll.u32 [#allocation2], 4
      %s20 = int_to_ptr.vmem [resolvable:$true] %s19
      %25 = dma.hbm_to_vmem [thread:$0]  %s18, 256, %s20, [#allocation3], 128, 128, 8
    $region5: #{tpu_custom_call.1} parent=1 // pred_fallthru
      _
    // Predicated region
    $region6: #{tpu_custom_call.1} parent=1 // pred_check
      _
    $region7: #{tpu_custom_call.1} parent=1 // pred_check_branch
      %27 = sbr.rel (0) target = $region9
    $region8: #{tpu_custom_call.1} parent=1 // pred_region
      %s28 = sadd.s32 0, 0
      %s29 = smul.u32 2, %s28
      %s31 = ssub.s32 256, 256
      %32 = vsyncadd [#allocation6], %s31
      %s33 = smul.addr %s29, 128
      %s34 = scalar_lea.hbm %s1, %s33
      %s35 = sshll.u32 [#allocation5], 4
      %s36 = int_to_ptr.vmem [resolvable:$true] %s35
      %41 = dma.hbm_to_vmem [thread:$0]  %s34, 256, %s36, [#allocation6], 128, 128, 8
    $region9: #{tpu_custom_call.1} parent=1 // pred_fallthru
      _
    // Predicated region
    $region10: #{tpu_custom_call.1} parent=1 // pred_check
      _
    $region11: #{tpu_custom_call.1} parent=1 // pred_check_branch
      %43 = sbr.rel (0) target = $region13
    $region12: #{tpu_custom_call.1} parent=1 // pred_region
      %44 = dma.done [#allocation3], 256
    $region13: #{tpu_custom_call.1} parent=1 // pred_fallthru
      _
    // Predicated region
    $region14: #{tpu_custom_call.1} parent=1 // pred_check
      _
    $region15: #{tpu_custom_call.1} parent=1 // pred_check_branch
      %46 = sbr.rel (0) target = $region17
    $region16: #{tpu_custom_call.1} parent=1 // pred_region
      %47 = dma.done [#allocation6], 256
    $region17: #{tpu_custom_call.1} parent=1 // pred_fallthru
      _
    %s48 = sadd.s32 0, 0
    %s49 = smul.u32 2, %s48
    %s50 = sadd.s32 0, 0
    %s51 = smul.u32 2, %s50
    %p52 = scmp.eq.s32.totalorder 0, 0
    // Predicated region
    $region18: #{tpu_custom_call.1} parent=1 // pred_check
      %p53 = pneg %p52
    $region19: #{tpu_custom_call.1} parent=1 // pred_check_branch
      %55 = sbr.rel (%p53) target = $region21
    $region20: #{tpu_custom_call.1} parent=1 // pred_region
      %56 = vst [vmem:[#allocation7] sm:$0xff] 0.0
      %57 = vst [vmem:[#allocation7 + $0x8] sm:$0xff] 0.0
      %58 = vst [vmem:[#allocation7 + $0x10] sm:$0xff] 0.0
    $region21: #{tpu_custom_call.1} parent=1 // pred_fallthru
      _
    %v59 = vld [vmem:[#allocation2] sm:$0xff]
    %v60 = vld [vmem:[#allocation2 + $0x8] sm:$0xff]
    %v61 = vld [vmem:[#allocation5] sm:$0xff]
    %v62 = vld [vmem:[#allocation5 + $0x8] sm:$0xff]
    %v63 = vsub.f32 0.0, %v59
    %v64 = vsub.f32 0.0, %v60
    %v65 = vmul.f32 %v63, 1.442695
    %v66 = vpow.pop %v65
    %v67 = vmul.f32 %v64, 1.442695
    %v68 = vpow.pop %v67
    %v69 = vadd.f32 %v66, 1.0
    %v70 = vadd.f32 %v68, 1.0
    %v71 = vrcp.pop %v69
    %v72 = vmul.f32 1.0, %v71
    %v73 = vrcp.pop %v70
    %v74 = vmul.f32 1.0, %v73
    %v75 = vadd.f32 %v66, 1.0
    %v76 = vlog2.pop %v75
    %v77 = vmul.f32 %v76, 0.6931472
    %v78 = vmul.f32 -0.5, %v66
    %v79 = vadd.f32 %v78, 1.0
    %v80 = vmul.f32 %v79, %v66
    %v81 = vand.u32 2147483647, %v66
    %vm82 = vcmp.lt.f32.partialorder %v81, 0.0004427343
    %v83 = vsel %vm82, %v80, %v77
    %v84 = vadd.f32 %v68, 1.0
    %v85 = vlog2.pop %v84
    %v86 = vmul.f32 %v85, 0.6931472
    %v87 = vmul.f32 -0.5, %v68
    %v88 = vadd.f32 %v87, 1.0
    %v89 = vmul.f32 %v88, %v68
    %v90 = vand.u32 2147483647, %v68
    %vm91 = vcmp.lt.f32.partialorder %v90, 0.0004427343
    %v92 = vsel %vm91, %v89, %v86
    %v93 = vsub.f32 0.0, %v83
    %v94 = vsub.f32 0.0, %v92
    %v95 = vmax.f32 %v93, -100.0
    %v96 = vmax.f32 %v94, -100.0
    %v97 = vsub.f32 %v93, %v59
    %v98 = vsub.f32 %v94, %v60
    %v99 = vmax.f32 %v97, -100.0
    %v100 = vmax.f32 %v98, -100.0
    %vm101 = vcmp.ge.f32.partialorder %v72, 1.0
    %vm102 = vcmp.ge.f32.partialorder %v74, 1.0
    %v103 = vsel %vm101, -100.0, %v99
    %v104 = vsel %vm102, -100.0, %v100
    %vm105 = vcmp.le.f32.partialorder %v72, 0.0
    %vm106 = vcmp.le.f32.partialorder %v74, 0.0
    %v107 = vsel %vm105, 0.0, %v103
    %v108 = vsel %vm106, 0.0, %v104
    %v109 = vsub.f32 %v95, %v107
    %v110 = vsub.f32 %v96, %v108
    %v111 = vmul.f32 %v61, %v109
    %v112 = vmul.f32 %v62, %v110
    %v113 = vadd.f32 %v107, %v111
    %v114 = vadd.f32 %v108, %v112
    %v115 = vsub.f32 0.0, %v113
    %v116 = vsub.f32 0.0, %v114
    %v117 = vmul.f32 %v72, %v61
    %v118 = vmul.f32 %v74, %v62
    %v119 = vadd.f32 %v72, %v61
    %v120 = vadd.f32 %v74, %v62
    %v121 = vld [vmem:[#allocation7] sm:$0xff]
    %v122 = vadd.f32 %v117, %v118
    %v123 = vadd.f32 %v121, %v122
    %124 = vst [vmem:[#allocation7] sm:$0xff] %v123
    %v125 = vld [vmem:[#allocation7 + $0x8] sm:$0xff]
    %v126 = vadd.f32 %v119, %v120
    %v127 = vadd.f32 %v125, %v126
    %128 = vst [vmem:[#allocation7 + $0x8] sm:$0xff] %v127
    %v129 = vld [vmem:[#allocation7 + $0x10] sm:$0xff]
    %v130 = vadd.f32 %v115, %v116
    %v131 = vadd.f32 %v129, %v130
    %132 = vst [vmem:[#allocation7 + $0x10] sm:$0xff] %v131
    // Predicated region
    $region22: #{tpu_custom_call.1} parent=1 // pred_check
      _
    $region23: #{tpu_custom_call.1} parent=1 // pred_check_branch
      %134 = sbr.rel (0) target = $region25
    $region24: #{tpu_custom_call.1} parent=1 // pred_region
      %s136 = ssub.s32 384, 384
      %137 = vsyncadd [#allocation4], %s136
      %s138 = sshll.u32 [#allocation7], 4
      %s139 = int_to_ptr.vmem [resolvable:$true] %s138
      %144 = dma.vmem_to_hbm [thread:$0]  %s139, 384, %s2, [#allocation4], 128, 128, 8
    $region25: #{tpu_custom_call.1} parent=1 // pred_fallthru
      _
    // Predicated region
    $region26: #{tpu_custom_call.1} parent=1 // pred_check
      _
    $region27: #{tpu_custom_call.1} parent=1 // pred_check_branch
      %146 = sbr.rel (0) target = $region29
    $region28: #{tpu_custom_call.1} parent=1 // pred_region
      %147 = dma.done [#allocation4], 384
    $region29: #{tpu_custom_call.1} parent=1 // pred_fallthru
      _
    %148 = vsyncpa [#allocation3], 1
    %149 = vsyncpa [#allocation6], 1
    %150 = vsyncpa [#allocation4], 1

</llo_original>
